<compile_context>
chip_gen: v7x
topology: tpu7x:2x2x1
jax: 0.10.0
libtpu: 0.0.40
codegen_flags: <defaults>
</compile_context>

<pallas_src>
import jax
import jax.numpy as jnp
from jax.experimental import pallas as pl
from jax.experimental.pallas import tpu as pltpu


def _round_up(n: int, m: int) -> int:
    return (n + m - 1) // m * m


def _make_kernel(n_layers: int, real_out: int, out_pad: int):
    """Build the fused MLP + log_softmax kernel for a fixed layer count."""

    def kernel(x_ref, *refs):
        # refs = (w0, b0, w1, b1, ..., w_last, b_last, out_ref)
        o_ref = refs[-1]
        p = refs[:-1]

        h = x_ref[...]  # bf16 activation tile (TM, d0_pad)

        # Hidden layers: linear -> relu -> dropout (identity in eval mode)
        for i in range(n_layers - 1):
            w = p[2 * i][...]          # bf16 (din_pad, dout_pad)
            b = p[2 * i + 1][...]      # f32  (1, dout_pad)
            z = jnp.dot(h, w, preferred_element_type=jnp.float32) + b
            h = jnp.maximum(z, 0.0).astype(x_ref.dtype)

        # Output layer
        w = p[-2][...]
        b = p[-1][...]
        z = jnp.dot(h, w, preferred_element_type=jnp.float32) + b

        # Mask padded output columns so the logsumexp only sees real logits.
        if real_out != out_pad:
            col = jax.lax.broadcasted_iota(jnp.int32, z.shape, 1)
            z = jnp.where(col < real_out, z, jnp.float32(-1e30))

        # Numerically-stable log_softmax over the feature axis (dim=1).
        m = jnp.max(z, axis=1, keepdims=True)
        lse = m + jnp.log(jnp.sum(jnp.exp(z - m), axis=1, keepdims=True))
        o_ref[...] = (z - lse).astype(o_ref.dtype)

    return kernel


def mlp_forward(x, params, *, tm=128):
    """x: (B, input_size) f32/bf16. params: list of (w, b), w (in, out), b (out,).

    Returns f32 log-probabilities of shape (B, output_size).
    """
    B, d_in = x.shape
    sizes = [d_in] + [w.shape[1] for (w, _) in params]
    padded = [_round_up(s, 128) for s in sizes]
    out_size, out_pad = sizes[-1], padded[-1]
    n_layers = len(params)
    b_pad = _round_up(max(B, 1), tm)

    # Pad activations: zero rows/cols contribute nothing to the matmuls.
    x_p = jnp.zeros((b_pad, padded[0]), jnp.bfloat16)
    x_p = x_p.at[:B, :d_in].set(x.astype(jnp.bfloat16))

    flat = []
    in_specs = [pl.BlockSpec((tm, padded[0]), lambda i: (i, 0))]
    for li, (w, b) in enumerate(params):
        din_p, dout_p = padded[li], padded[li + 1]
        w_p = jnp.zeros((din_p, dout_p), jnp.bfloat16)
        w_p = w_p.at[: w.shape[0], : w.shape[1]].set(w.astype(jnp.bfloat16))
        b_p = jnp.zeros((1, dout_p), jnp.float32)
        b_p = b_p.at[0, : b.shape[0]].set(b.astype(jnp.float32))
        flat += [w_p, b_p]
        # Constant index_map: weights/biases stay resident in VMEM across grid steps.
        in_specs.append(pl.BlockSpec((din_p, dout_p), lambda i: (0, 0)))
        in_specs.append(pl.BlockSpec((1, dout_p), lambda i: (0, 0)))

    grid = (b_pad // tm,)

    # Advisory cost estimate for XLA's scheduler (padded problem sizes).
    flops = 2 * b_pad * sum(padded[i] * padded[i + 1] for i in range(n_layers))
    transcendentals = b_pad * (out_pad + 1)  # exp per logit + log per row
    param_bytes = sum(int(a.size) * a.dtype.itemsize for a in flat)
    bytes_accessed = int(x_p.size) * 2 + param_bytes + b_pad * out_pad * 4
    cost = pl.CostEstimate(
        flops=flops, transcendentals=transcendentals, bytes_accessed=bytes_accessed
    )

    # VMEM budget: resident params + double-buffered in/out tiles + live hiddens.
    tile_bytes = tm * padded[0] * 2 + tm * out_pad * 4
    hidden_bytes = tm * max(padded) * 4
    vmem_need = param_bytes + 2 * tile_bytes + 4 * hidden_bytes
    vmem_limit = int(min(max(2 * vmem_need, 32 << 20), 96 << 20))

    out_p = pl.pallas_call(
        _make_kernel(n_layers, out_size, out_pad),
        out_shape=jax.ShapeDtypeStruct((b_pad, out_pad), jnp.float32),
        grid=grid,
        in_specs=in_specs,
        out_specs=pl.BlockSpec((tm, out_pad), lambda i: (i, 0)),
        compiler_params=pltpu.CompilerParams(
            dimension_semantics=("parallel",),  # shard batch tiles across TCs (v7x)
            vmem_limit_bytes=vmem_limit,
        ),
        cost_estimate=cost,
    )(x_p, *flat)

    return out_p[:B, :out_size]


def init_params(key, input_size, hidden_layers, output_size):
    """Deterministic parameter init (shapes match the PyTorch module)."""
    sizes = [input_size] + list(hidden_layers) + [output_size]
    params = []
    for d_in, d_out in zip(sizes[:-1], sizes[1:]):
        key, kw, kb = jax.random.split(key, 3)
        bound = 1.0 / jnp.sqrt(d_in)
        w = jax.random.uniform(kw, (d_in, d_out), jnp.float32, -bound, bound)
        b = jax.random.uniform(kb, (d_out,), jnp.float32, -bound, bound)
        params.append((w, b))
    return params


def reference_forward(x, params):
    """Pure-JAX reference matching the kernel's bf16-operand / f32-accumulate numerics."""
    h = x.astype(jnp.bfloat16).astype(jnp.float32)
    for w, b in params[:-1]:
        z = h @ w.astype(jnp.bfloat16).astype(jnp.float32) + b
        h = jnp.maximum(z, 0.0).astype(jnp.bfloat16).astype(jnp.float32)
    w, b = params[-1]
    z = h @ w.astype(jnp.bfloat16).astype(jnp.float32) + b
    return jax.nn.log_softmax(z, axis=1)


if __name__ == "__main__":
    # Small shapes consistent with the module's forward
    batch = 8
    input_size = 32
    hidden_layers = [64, 32]
    output_size = 16
    drop_p = 0.5  # dropout is identity in the eval-mode forward

    key = jax.random.PRNGKey(0)
    key, kx = jax.random.split(key)
    x = jax.random.normal(kx, (batch, input_size), jnp.float32)
    params = init_params(key, input_size, hidden_layers, output_size)

    out = jax.block_until_ready(mlp_forward(x, params, tm=128))
    ref = reference_forward(x, params)
    assert out.shape == (batch, output_size)
    assert out.dtype == jnp.float32
    assert jnp.allclose(out, ref, atol=2e-2, rtol=2e-2), float(
        jnp.max(jnp.abs(out - ref))
    )

    # Multi-step grid check: batch > TM exercises the pipelined batch tiling
    # with weights held VMEM-resident across grid steps.
    key, kx2 = jax.random.split(key)
    x2 = jax.random.normal(kx2, (300, input_size), jnp.float32)
    out2 = jax.block_until_ready(mlp_forward(x2, params, tm=128))
    ref2 = reference_forward(x2, params)
    assert out2.shape == (300, output_size)
    assert jnp.allclose(out2, ref2, atol=2e-2, rtol=2e-2)

    print("KERNEL_OK")
</pallas_src>

<mosaic_0001>
module attributes {stable_mosaic.version = 11 : i64} {
  func.func @kernel(%arg0: i32, %arg1: memref<128x128xbf16, #tpu.memory_space<vmem>>, %arg2: memref<128x128xbf16, #tpu.memory_space<vmem>>, %arg3: memref<1x128xf32, #tpu.memory_space<vmem>>, %arg4: memref<128x128xbf16, #tpu.memory_space<vmem>>, %arg5: memref<1x128xf32, #tpu.memory_space<vmem>>, %arg6: memref<128x128xbf16, #tpu.memory_space<vmem>>, %arg7: memref<1x128xf32, #tpu.memory_space<vmem>>, %arg8: memref<128x128xf32, #tpu.memory_space<vmem>>) attributes {dimension_semantics = [#tpu.dimension_semantics<parallel>], iteration_bounds = array<i64: 1>, scalar_prefetch = 0 : i64, scratch_operands = 0 : i64, tpu.core_type = #tpu.core_type<tc>, window_params = [{transform_indices = @transform_0, window_bounds = array<i64: 128, 128>}, {pipeline_mode = #tpu.pipeline_mode<synchronous>, transform_indices = @transform_1, window_bounds = array<i64: 128, 128>}, {pipeline_mode = #tpu.pipeline_mode<synchronous>, transform_indices = @transform_2, window_bounds = array<i64: 1, 128>}, {pipeline_mode = #tpu.pipeline_mode<synchronous>, transform_indices = @transform_3, window_bounds = array<i64: 128, 128>}, {pipeline_mode = #tpu.pipeline_mode<synchronous>, transform_indices = @transform_4, window_bounds = array<i64: 1, 128>}, {pipeline_mode = #tpu.pipeline_mode<synchronous>, transform_indices = @transform_5, window_bounds = array<i64: 128, 128>}, {pipeline_mode = #tpu.pipeline_mode<synchronous>, transform_indices = @transform_6, window_bounds = array<i64: 1, 128>}, {transform_indices = @transform_7, window_bounds = array<i64: 128, 128>}]} {
    %c0 = arith.constant 0 : index
    %c0_0 = arith.constant 0 : index
    %0 = vector.load %arg1[%c0, %c0_0] : memref<128x128xbf16, #tpu.memory_space<vmem>>, vector<128x128xbf16>
    %c0_1 = arith.constant 0 : index
    %c0_2 = arith.constant 0 : index
    %1 = vector.load %arg2[%c0_1, %c0_2] : memref<128x128xbf16, #tpu.memory_space<vmem>>, vector<128x128xbf16>
    %c0_3 = arith.constant 0 : index
    %c0_4 = arith.constant 0 : index
    %2 = vector.load %arg3[%c0_3, %c0_4] : memref<1x128xf32, #tpu.memory_space<vmem>>, vector<1x128xf32>
    %cst = arith.constant dense<0.000000e+00> : vector<128x128xf32>
    %3 = tpu.matmul %0, %1, %cst {dimension_numbers = #tpu.dot_dimension_numbers<[1], [0], [0], [1], [0, 0, 1, 1], [], []>} : vector<128x128xbf16>, vector<128x128xbf16>, vector<128x128xf32> -> vector<128x128xf32>
    %4 = vector.broadcast %2 : vector<1x128xf32> to vector<128x128xf32>
    %5 = arith.addf %3, %4 : vector<128x128xf32>
    %cst_5 = arith.constant 0.000000e+00 : f32
    %6 = vector.broadcast %cst_5 : f32 to vector<128x128xf32>
    %7 = arith.maximumf %5, %6 : vector<128x128xf32>
    %8 = arith.truncf %7 : vector<128x128xf32> to vector<128x128xbf16>
    %c0_6 = arith.constant 0 : index
    %c0_7 = arith.constant 0 : index
    %9 = vector.load %arg4[%c0_6, %c0_7] : memref<128x128xbf16, #tpu.memory_space<vmem>>, vector<128x128xbf16>
    %c0_8 = arith.constant 0 : index
    %c0_9 = arith.constant 0 : index
    %10 = vector.load %arg5[%c0_8, %c0_9] : memref<1x128xf32, #tpu.memory_space<vmem>>, vector<1x128xf32>
    %cst_10 = arith.constant dense<0.000000e+00> : vector<128x128xf32>
    %11 = tpu.matmul %8, %9, %cst_10 {dimension_numbers = #tpu.dot_dimension_numbers<[1], [0], [0], [1], [0, 0, 1, 1], [], []>} : vector<128x128xbf16>, vector<128x128xbf16>, vector<128x128xf32> -> vector<128x128xf32>
    %12 = vector.broadcast %10 : vector<1x128xf32> to vector<128x128xf32>
    %13 = arith.addf %11, %12 : vector<128x128xf32>
    %cst_11 = arith.constant 0.000000e+00 : f32
    %14 = vector.broadcast %cst_11 : f32 to vector<128x128xf32>
    %15 = arith.maximumf %13, %14 : vector<128x128xf32>
    %16 = arith.truncf %15 : vector<128x128xf32> to vector<128x128xbf16>
    %c0_12 = arith.constant 0 : index
    %c0_13 = arith.constant 0 : index
    %17 = vector.load %arg6[%c0_12, %c0_13] : memref<128x128xbf16, #tpu.memory_space<vmem>>, vector<128x128xbf16>
    %c0_14 = arith.constant 0 : index
    %c0_15 = arith.constant 0 : index
    %18 = vector.load %arg7[%c0_14, %c0_15] : memref<1x128xf32, #tpu.memory_space<vmem>>, vector<1x128xf32>
    %cst_16 = arith.constant dense<0.000000e+00> : vector<128x128xf32>
    %19 = tpu.matmul %16, %17, %cst_16 {dimension_numbers = #tpu.dot_dimension_numbers<[1], [0], [0], [1], [0, 0, 1, 1], [], []>} : vector<128x128xbf16>, vector<128x128xbf16>, vector<128x128xf32> -> vector<128x128xf32>
    %20 = vector.broadcast %18 : vector<1x128xf32> to vector<128x128xf32>
    %21 = arith.addf %19, %20 : vector<128x128xf32>
    %22 = tpu.iota {dimensions = array<i32: 1>} : vector<128x128xi32>
    %c16_i32 = arith.constant 16 : i32
    %23 = vector.broadcast %c16_i32 : i32 to vector<128x128xi32>
    %24 = arith.cmpi slt, %22, %23 : vector<128x128xi32>
    %cst_17 = arith.constant -1.000000e+30 : f32
    %25 = vector.broadcast %cst_17 : f32 to vector<128x128xf32>
    %26 = arith.select %24, %21, %25 : vector<128x128xi1>, vector<128x128xf32>
    %cst_18 = arith.constant dense<0xFF800000> : vector<128xf32>
    %27 = vector.multi_reduction <maximumf>, %26, %cst_18 [1] : vector<128x128xf32> to vector<128xf32>
    %28 = vector.shape_cast %27 : vector<128xf32> to vector<128x1xf32>
    %29 = vector.broadcast %28 : vector<128x1xf32> to vector<128x128xf32>
    %30 = arith.subf %26, %29 : vector<128x128xf32>
    %31 = math.exp %30 : vector<128x128xf32>
    %cst_19 = arith.constant dense<0.000000e+00> : vector<128xf32>
    %32 = vector.multi_reduction <add>, %31, %cst_19 [1] : vector<128x128xf32> to vector<128xf32>
    %33 = vector.shape_cast %32 : vector<128xf32> to vector<128x1xf32>
    %34 = math.log %33 : vector<128x1xf32>
    %35 = arith.addf %28, %34 : vector<128x1xf32>
    %36 = vector.broadcast %35 : vector<128x1xf32> to vector<128x128xf32>
    %37 = arith.subf %26, %36 : vector<128x128xf32>
    %c0_20 = arith.constant 0 : index
    %c0_21 = arith.constant 0 : index
    %38 = vector.load %arg8[%c0_20, %c0_21] : memref<128x128xf32, #tpu.memory_space<vmem>>, vector<128x128xf32>
    tpu.vector_store %arg8[%c0_20, %c0_21], %37 {strides = array<i32>} : memref<128x128xf32, #tpu.memory_space<vmem>>, vector<128x128xf32>,
    return
  }
  func.func @transform_0(%arg0: i32) -> (i32, i32) {
    %c0_i32 = arith.constant 0 : i32
    %c0_i32_0 = arith.constant 0 : i32
    return %arg0, %c0_i32 : i32, i32
  }
  func.func @transform_1(%arg0: i32) -> (i32, i32) {
    %c0_i32 = arith.constant 0 : i32
    %c0_i32_0 = arith.constant 0 : i32
    %c0_i32_1 = arith.constant 0 : i32
    return %c0_i32, %c0_i32_0 : i32, i32
  }
  func.func @transform_2(%arg0: i32) -> (i32, i32) {
    %c0_i32 = arith.constant 0 : i32
    %c0_i32_0 = arith.constant 0 : i32
    %c0_i32_1 = arith.constant 0 : i32
    return %c0_i32, %c0_i32_0 : i32, i32
  }
  func.func @transform_3(%arg0: i32) -> (i32, i32) {
    %c0_i32 = arith.constant 0 : i32
    %c0_i32_0 = arith.constant 0 : i32
    %c0_i32_1 = arith.constant 0 : i32
    return %c0_i32, %c0_i32_0 : i32, i32
  }
  func.func @transform_4(%arg0: i32) -> (i32, i32) {
    %c0_i32 = arith.constant 0 : i32
    %c0_i32_0 = arith.constant 0 : i32
    %c0_i32_1 = arith.constant 0 : i32
    return %c0_i32, %c0_i32_0 : i32, i32
  }
  func.func @transform_5(%arg0: i32) -> (i32, i32) {
    %c0_i32 = arith.constant 0 : i32
    %c0_i32_0 = arith.constant 0 : i32
    %c0_i32_1 = arith.constant 0 : i32
    return %c0_i32, %c0_i32_0 : i32, i32
  }
  func.func @transform_6(%arg0: i32) -> (i32, i32) {
    %c0_i32 = arith.constant 0 : i32
    %c0_i32_0 = arith.constant 0 : i32
    %c0_i32_1 = arith.constant 0 : i32
    return %c0_i32, %c0_i32_0 : i32, i32
  }
  func.func @transform_7(%arg0: i32) -> (i32, i32) {
    %c0_i32 = arith.constant 0 : i32
    %c0_i32_0 = arith.constant 0 : i32
    return %arg0, %c0_i32 : i32, i32
  }
}

</mosaic_0001>

<llo_original>
// kernel: tpu_custom_call.1
$region0: #{tpu_custom_call.1}
  #allocation0 [shape = 'u32[]', space=smem, size = 0x4, offset = 0x4, fixed_abs, tag = 'smem constant byte address 0x4 - core index']
  #allocation1 [shape = 'u32[144,128]{1,0:T(1,128)}', space=vmem, size = 0x12000, scoped, tag = 'internal scratch']
  %s0 = inlined_call_operand.hbm [shape: bf16[128,128], index: 0, kind: input, shape index: {}]
  %s1 = inlined_call_operand.hbm [shape: bf16[128,128], index: 1, kind: input, shape index: {}]
  %s2 = inlined_call_operand.vmem [shape: f32[1,128], index: 2, kind: input, shape index: {}]
  %s3 = inlined_call_operand.hbm [shape: bf16[128,128], index: 3, kind: input, shape index: {}]
  %s4 = inlined_call_operand.vmem [shape: f32[1,128], index: 4, kind: input, shape index: {}]
  %s5 = inlined_call_operand.hbm [shape: bf16[128,128], index: 5, kind: input, shape index: {}]
  %s6 = inlined_call_operand.vmem [shape: f32[1,128], index: 6, kind: input, shape index: {}]
  %s7 = inlined_call_operand.hbm [shape: f32[128,128], index: 7, kind: output, shape index: {}]
  %s8 = sld [smem:[#allocation0]]
  $region54: #{tpu_custom_call.1} parent=0
    _
  %s10 = ssub.s32 1, %s8
  %s11 = scalar_select 0, %s10, %s8
  $region1: #{tpu_custom_call.1} parent=0
    #allocation2 [shape = 'u8[32768]{0}', space=vmem, size = 0x8000, scoped, tag = 'input window, operand 0, single buffered']
    #allocation3 [shape = 's32[1]{0}', space=sflag, size = 0x4, scoped, tag = 'scoped memory for tpu_custom_call.1']
    #allocation4 [shape = 's32[1]{0}', space=sflag, size = 0x4, scoped, tag = 'scoped memory for tpu_custom_call.1']
    #allocation5 [shape = 'u8[32768]{0}', space=vmem, size = 0x8000, scoped, tag = 'input window, operand 1, single buffered']
    #allocation6 [shape = 's32[1]{0}', space=sflag, size = 0x4, scoped, tag = 'scoped memory for tpu_custom_call.1']
    #allocation7 [shape = 'u8[32768]{0}', space=vmem, size = 0x8000, scoped, tag = 'input window, operand 3, single buffered']
    #allocation8 [shape = 'u8[32768]{0}', space=vmem, size = 0x8000, scoped, tag = 'input window, operand 5, single buffered']
    #allocation9 [shape = 's32[1]{0}', space=sflag, size = 0x4, scoped, tag = 'scoped memory for tpu_custom_call.1']
    #allocation10 [shape = 'u8[65536]{0}', space=vmem, size = 0x10000, scoped, tag = 'output window, operand 0, single buffered']
    %12 = vsyncpa [#allocation3], 0
    %13 = vsyncpa [#allocation6], 0
    %14 = vsyncpa [#allocation9], 0
    %15 = vsyncpa [#allocation4], 0
    // Predicated region
    $region2: #{tpu_custom_call.1} parent=1 // pred_check
      _
    $region3: #{tpu_custom_call.1} parent=1 // pred_check_branch
      %17 = sbr.rel (0) target = $region5
    $region4: #{tpu_custom_call.1} parent=1 // pred_region
      %s19 = ssub.s32 1024, 1024
      %20 = vsyncadd [#allocation3], %s19
      %s21 = sshll.u32 [#allocation2], 4
      %s22 = int_to_ptr.vmem [resolvable:$true] %s21
      %27 = dma.hbm_to_vmem [thread:$0]  %s0, 1024, %s22, [#allocation3], 64, 64, 4
    $region5: #{tpu_custom_call.1} parent=1 // pred_fallthru
      _
    // Predicated region
    $region6: #{tpu_custom_call.1} parent=1 // pred_check
      _
    $region7: #{tpu_custom_call.1} parent=1 // pred_check_branch
      %29 = sbr.rel (0) target = $region9
    $region8: #{tpu_custom_call.1} parent=1 // pred_region
      %s31 = ssub.s32 1024, 1024
      %32 = vsyncadd [#allocation6], %s31
      %s33 = sshll.u32 [#allocation5], 4
      %s34 = int_to_ptr.vmem [resolvable:$true] %s33
      %39 = dma.hbm_to_vmem [thread:$0]  %s1, 1024, %s34, [#allocation6], 64, 64, 4
    $region9: #{tpu_custom_call.1} parent=1 // pred_fallthru
      _
    // Predicated region
    $region10: #{tpu_custom_call.1} parent=1 // pred_check
      _
    $region11: #{tpu_custom_call.1} parent=1 // pred_check_branch
      %41 = sbr.rel (0) target = $region13
    $region12: #{tpu_custom_call.1} parent=1 // pred_region
      _
    $region13: #{tpu_custom_call.1} parent=1 // pred_fallthru
      _
    // Predicated region
    $region14: #{tpu_custom_call.1} parent=1 // pred_check
      _
    $region15: #{tpu_custom_call.1} parent=1 // pred_check_branch
      %43 = sbr.rel (0) target = $region17
    $region16: #{tpu_custom_call.1} parent=1 // pred_region
      %s45 = ssub.s32 1024, 1024
      %46 = vsyncadd [#allocation6], %s45
      %s47 = sshll.u32 [#allocation7], 4
      %s48 = int_to_ptr.vmem [resolvable:$true] %s47
      %53 = dma.hbm_to_vmem [thread:$0]  %s3, 1024, %s48, [#allocation6], 64, 64, 4
    $region17: #{tpu_custom_call.1} parent=1 // pred_fallthru
      _
    // Predicated region
    $region18: #{tpu_custom_call.1} parent=1 // pred_check
      _
    $region19: #{tpu_custom_call.1} parent=1 // pred_check_branch
      %55 = sbr.rel (0) target = $region21
    $region20: #{tpu_custom_call.1} parent=1 // pred_region
      _
    $region21: #{tpu_custom_call.1} parent=1 // pred_fallthru
      _
    // Predicated region
    $region22: #{tpu_custom_call.1} parent=1 // pred_check
      _
    $region23: #{tpu_custom_call.1} parent=1 // pred_check_branch
      %57 = sbr.rel (0) target = $region25
    $region24: #{tpu_custom_call.1} parent=1 // pred_region
      %s59 = ssub.s32 1024, 1024
      %60 = vsyncadd [#allocation9], %s59
      %s61 = sshll.u32 [#allocation8], 4
      %s62 = int_to_ptr.vmem [resolvable:$true] %s61
      %67 = dma.hbm_to_vmem [thread:$0]  %s5, 1024, %s62, [#allocation9], 64, 64, 4
    $region25: #{tpu_custom_call.1} parent=1 // pred_fallthru
      _
    // Predicated region
    $region26: #{tpu_custom_call.1} parent=1 // pred_check
      _
    $region27: #{tpu_custom_call.1} parent=1 // pred_check_branch
      %69 = sbr.rel (0) target = $region29
    $region28: #{tpu_custom_call.1} parent=1 // pred_region
      _
    $region29: #{tpu_custom_call.1} parent=1 // pred_fallthru
      _
    // Predicated region
    $region30: #{tpu_custom_call.1} parent=1 // pred_check
      _
    $region31: #{tpu_custom_call.1} parent=1 // pred_check_branch
      %71 = sbr.rel (0) target = $region33
    $region32: #{tpu_custom_call.1} parent=1 // pred_region
      %72 = dma.done [#allocation3], 1024
    $region33: #{tpu_custom_call.1} parent=1 // pred_fallthru
      _
    // Predicated region
    $region34: #{tpu_custom_call.1} parent=1 // pred_check
      _
    $region35: #{tpu_custom_call.1} parent=1 // pred_check_branch
      %74 = sbr.rel (0) target = $region37
    $region36: #{tpu_custom_call.1} parent=1 // pred_region
      %75 = dma.done [#allocation6], 1024
    $region37: #{tpu_custom_call.1} parent=1 // pred_fallthru
      _
    // Predicated region
    $region38: #{tpu_custom_call.1} parent=1 // pred_check
      _
    $region39: #{tpu_custom_call.1} parent=1 // pred_check_branch
      %77 = sbr.rel (0) target = $region41
    $region40: #{tpu_custom_call.1} parent=1 // pred_region
      %78 = dma.done [#allocation6], 1024
    $region41: #{tpu_custom_call.1} parent=1 // pred_fallthru
      _
    // Predicated region
    $region42: #{tpu_custom_call.1} parent=1 // pred_check
      _
    $region43: #{tpu_custom_call.1} parent=1 // pred_check_branch
      %80 = sbr.rel (0) target = $region45
    $region44: #{tpu_custom_call.1} parent=1 // pred_region
      %81 = dma.done [#allocation9], 1024
    $region45: #{tpu_custom_call.1} parent=1 // pred_fallthru
      _
    %v83 = vld [vmem:[#allocation2] sm:$0xf]
    %v84 = vld [vmem:[#allocation2 + $0x4] sm:$0xf]
    %v85 = vld [vmem:[#allocation2 + $0x8] sm:$0xf]
    %v86 = vld [vmem:[#allocation2 + $0xc] sm:$0xf]
    %v87 = vld [vmem:[#allocation2 + $0x10] sm:$0xf]
    %v88 = vld [vmem:[#allocation2 + $0x14] sm:$0xf]
    %v89 = vld [vmem:[#allocation2 + $0x18] sm:$0xf]
    %v90 = vld [vmem:[#allocation2 + $0x1c] sm:$0xf]
    %v91 = vld [vmem:[#allocation2 + $0x20] sm:$0xf]
    %v92 = vld [vmem:[#allocation2 + $0x24] sm:$0xf]
    %v93 = vld [vmem:[#allocation2 + $0x28] sm:$0xf]
    %v94 = vld [vmem:[#allocation2 + $0x2c] sm:$0xf]
    %v95 = vld [vmem:[#allocation2 + $0x30] sm:$0xf]
    %v96 = vld [vmem:[#allocation2 + $0x34] sm:$0xf]
    %v97 = vld [vmem:[#allocation2 + $0x38] sm:$0xf]
    %v98 = vld [vmem:[#allocation2 + $0x3c] sm:$0xf]
    %v99 = vld [vmem:[#allocation5] sm:$0xf]
    %v100 = vld [vmem:[#allocation5 + $0x4] sm:$0xf]
    %v101 = vld [vmem:[#allocation5 + $0x8] sm:$0xf]
    %v102 = vld [vmem:[#allocation5 + $0xc] sm:$0xf]
    %v103 = vld [vmem:[#allocation5 + $0x10] sm:$0xf]
    %v104 = vld [vmem:[#allocation5 + $0x14] sm:$0xf]
    %v105 = vld [vmem:[#allocation5 + $0x18] sm:$0xf]
    %v106 = vld [vmem:[#allocation5 + $0x1c] sm:$0xf]
    %v107 = vld [vmem:[#allocation5 + $0x20] sm:$0xf]
    %v108 = vld [vmem:[#allocation5 + $0x24] sm:$0xf]
    %v109 = vld [vmem:[#allocation5 + $0x28] sm:$0xf]
    %v110 = vld [vmem:[#allocation5 + $0x2c] sm:$0xf]
    %v111 = vld [vmem:[#allocation5 + $0x30] sm:$0xf]
    %v112 = vld [vmem:[#allocation5 + $0x34] sm:$0xf]
    %v113 = vld [vmem:[#allocation5 + $0x38] sm:$0xf]
    %v114 = vld [vmem:[#allocation5 + $0x3c] sm:$0xf]
    %v115 = vld [vmem:[%s2] sm:$0x1]
    %v117 = vlaneseq
    %v118 = vshrl.u32 %v117, 7
    %v119 = vsub.s32 0, %v118
    %v120 = vrot.slane %v115, %v119
    %v138 = vunpack.c.l.b16 %v83
    %v139 = vunpack.c.l.b16 %v84
    %v140 = vunpack.c.l.b16 %v85
    %v141 = vunpack.c.l.b16 %v86
    %v142 = vunpack.c.l.b16 %v87
    %v143 = vunpack.c.l.b16 %v88
    %v144 = vunpack.c.l.b16 %v89
    %v145 = vunpack.c.l.b16 %v90
    %v146 = vunpack.c.l.b16 %v91
    %v147 = vunpack.c.l.b16 %v92
    %v148 = vunpack.c.l.b16 %v93
    %v149 = vunpack.c.l.b16 %v94
    %v150 = vunpack.c.l.b16 %v95
    %v151 = vunpack.c.l.b16 %v96
    %v152 = vunpack.c.l.b16 %v97
    %v153 = vunpack.c.l.b16 %v98
    %v154 = vpack.c.b16 %v139, %v138
    %v155 = vpack.c.b16 %v141, %v140
    %v156 = vpack.c.b16 %v143, %v142
    %v157 = vpack.c.b16 %v145, %v144
    %v158 = vpack.c.b16 %v147, %v146
    %v159 = vpack.c.b16 %v149, %v148
    %v160 = vpack.c.b16 %v151, %v150
    %v161 = vpack.c.b16 %v153, %v152
    %v186 = vunpack.c.l.b16 %v99
    %v187 = vunpack.c.l.b16 %v100
    %v188 = vunpack.c.l.b16 %v101
    %v189 = vunpack.c.l.b16 %v102
    %v190 = vunpack.c.l.b16 %v103
    %v191 = vunpack.c.l.b16 %v104
    %v192 = vunpack.c.l.b16 %v105
    %v193 = vunpack.c.l.b16 %v106
    %v194 = vunpack.c.l.b16 %v107
    %v195 = vunpack.c.l.b16 %v108
    %v196 = vunpack.c.l.b16 %v109
    %v197 = vunpack.c.l.b16 %v110
    %v198 = vunpack.c.l.b16 %v111
    %v199 = vunpack.c.l.b16 %v112
    %v200 = vunpack.c.l.b16 %v113
    %v201 = vunpack.c.l.b16 %v114
    %v202 = vpack.c.b16 %v187, %v186
    %v203 = vpack.c.b16 %v189, %v188
    %v204 = vpack.c.b16 %v191, %v190
    %v205 = vpack.c.b16 %v193, %v192
    %v206 = vpack.c.b16 %v195, %v194
    %v207 = vpack.c.b16 %v197, %v196
    %v208 = vpack.c.b16 %v199, %v198
    %v209 = vpack.c.b16 %v201, %v200
    %218 = vmatprep.subr.bf16.mxu0 0
    %219 = vmatpush1.bf16.msra.mxu0 %v202
    %220 = vmatprep.subr.bf16.mxu0 0
    %221 = vmatpush1.bf16.msra.mxu0 %v203
    %222 = vmatprep.subr.bf16.mxu0 0
    %223 = vmatpush1.bf16.msra.mxu0 %v204
    %224 = vmatprep.subr.bf16.mxu0 0
    %225 = vmatpush1.bf16.msra.mxu0 %v205
    %226 = vmatprep.subr.bf16.mxu0 0
    %227 = vmatpush1.bf16.msra.mxu0 %v206
    %228 = vmatprep.subr.bf16.mxu0 0
    %229 = vmatpush1.bf16.msra.mxu0 %v207
    %230 = vmatprep.subr.bf16.mxu0 0
    %231 = vmatpush1.bf16.msra.mxu0 %v208
    %232 = vmatprep.subr.bf16.mxu0 0
    %233 = vmatpush1.bf16.msra.mxu0 %v209
    %234 = vmatprep.subr.bf16.mxu0 0
    %235 = vmatpush1.bf16.msra.mxu0 0
    %236 = vmatprep.subr.bf16.mxu0 0
    %237 = vmatpush1.bf16.msra.mxu0 0
    %238 = vmatprep.subr.bf16.mxu0 0
    %239 = vmatpush1.bf16.msra.mxu0 0
    %240 = vmatprep.subr.bf16.mxu0 0
    %241 = vmatpush1.bf16.msra.mxu0 0
    %242 = vmatprep.subr.bf16.mxu0 0
    %243 = vmatpush1.bf16.msra.mxu0 0
    %244 = vmatprep.subr.bf16.mxu0 0
    %245 = vmatpush1.bf16.msra.mxu0 0
    %246 = vmatprep.subr.bf16.mxu0 0
    %247 = vmatpush1.bf16.msra.mxu0 0
    %248 = vmatprep.subr.bf16.mxu0 0
    %249 = vmatpush1.bf16.msra.mxu0 0
    %250 = vmatprep.mubr.bf16.mxu0 0
    %251 = vmatmul.mubr.bf16.gmra.mrb[0].mxu0 %v154
    %v252 = vpop.f32.mrb[0].mxu0
    %v253 = vadd.f32 %v120, %v252
    %v254 = vpop.f32.mrb[0].mxu0
    %v255 = vpop.f32.mrb[0].mxu0
    %v256 = vadd.f32 %v120, %v255
    %v257 = vpop.f32.mrb[0].mxu0
    %258 = vmatprep.mubr.bf16.mxu0 0
    %259 = vmatmul.mubr.bf16.gmra.mrb[0].mxu0 %v155
    %v260 = vpop.f32.mrb[0].mxu0
    %v261 = vadd.f32 %v120, %v260
    %v262 = vpop.f32.mrb[0].mxu0
    %v263 = vpop.f32.mrb[0].mxu0
    %v264 = vadd.f32 %v120, %v263
    %v265 = vpop.f32.mrb[0].mxu0
    %266 = vmatprep.mubr.bf16.mxu0 0
    %267 = vmatmul.mubr.bf16.gmra.mrb[0].mxu0 %v156
    %v268 = vpop.f32.mrb[0].mxu0
    %v269 = vadd.f32 %v120, %v268
    %v270 = vpop.f32.mrb[0].mxu0
    %v271 = vpop.f32.mrb[0].mxu0
    %v272 = vadd.f32 %v120, %v271
    %v273 = vpop.f32.mrb[0].mxu0
    %274 = vmatprep.mubr.bf16.mxu0 0
    %275 = vmatmul.mubr.bf16.gmra.mrb[0].mxu0 %v157
    %v276 = vpop.f32.mrb[0].mxu0
    %v277 = vadd.f32 %v120, %v276
    %v278 = vpop.f32.mrb[0].mxu0
    %v279 = vpop.f32.mrb[0].mxu0
    %v280 = vadd.f32 %v120, %v279
    %v281 = vpop.f32.mrb[0].mxu0
    %282 = vmatprep.mubr.bf16.mxu0 0
    %283 = vmatmul.mubr.bf16.gmra.mrb[0].mxu0 %v158
    %v284 = vpop.f32.mrb[0].mxu0
    %v285 = vadd.f32 %v120, %v284
    %v286 = vpop.f32.mrb[0].mxu0
    %v287 = vpop.f32.mrb[0].mxu0
    %v288 = vadd.f32 %v120, %v287
    %v289 = vpop.f32.mrb[0].mxu0
    %290 = vmatprep.mubr.bf16.mxu0 0
    %291 = vmatmul.mubr.bf16.gmra.mrb[0].mxu0 %v159
    %v292 = vpop.f32.mrb[0].mxu0
    %v293 = vadd.f32 %v120, %v292
    %v294 = vpop.f32.mrb[0].mxu0
    %v295 = vpop.f32.mrb[0].mxu0
    %v296 = vadd.f32 %v120, %v295
    %v297 = vpop.f32.mrb[0].mxu0
    %298 = vmatprep.mubr.bf16.mxu0 0
    %299 = vmatmul.mubr.bf16.gmra.mrb[0].mxu0 %v160
    %v300 = vpop.f32.mrb[0].mxu0
    %v301 = vadd.f32 %v120, %v300
    %v302 = vpop.f32.mrb[0].mxu0
    %v303 = vpop.f32.mrb[0].mxu0
    %v304 = vadd.f32 %v120, %v303
    %v305 = vpop.f32.mrb[0].mxu0
    %306 = vmatprep.mubr.bf16.mxu0 0
    %307 = vmatmul.mubr.bf16.gmra.mrb[0].mxu0 %v161
    %v308 = vpop.f32.mrb[0].mxu0
    %v309 = vadd.f32 %v120, %v308
    %v310 = vpop.f32.mrb[0].mxu0
    %v311 = vpop.f32.mrb[0].mxu0
    %v312 = vadd.f32 %v120, %v311
    %v313 = vpop.f32.mrb[0].mxu0
    %314 = vdwg.mxu0
    %v315 = vmax.f32 %v253, 0.0
    %v316 = vmax.f32 %v256, 0.0
    %v317 = vmax.f32 %v261, 0.0
    %v318 = vmax.f32 %v264, 0.0
    %v319 = vmax.f32 %v269, 0.0
    %v320 = vmax.f32 %v272, 0.0
    %v321 = vmax.f32 %v277, 0.0
    %v322 = vmax.f32 %v280, 0.0
    %v323 = vmax.f32 %v285, 0.0
    %v324 = vmax.f32 %v288, 0.0
    %v325 = vmax.f32 %v293, 0.0
    %v326 = vmax.f32 %v296, 0.0
    %v327 = vmax.f32 %v301, 0.0
    %v328 = vmax.f32 %v304, 0.0
    %v329 = vmax.f32 %v309, 0.0
    %v330 = vmax.f32 %v312, 0.0
    %v331 = vpack.c.bf16 %v316, %v315
    %v332 = vpack.c.bf16 %v318, %v317
    %v333 = vpack.c.bf16 %v320, %v319
    %v334 = vpack.c.bf16 %v322, %v321
    %v335 = vpack.c.bf16 %v324, %v323
    %v336 = vpack.c.bf16 %v326, %v325
    %v337 = vpack.c.bf16 %v328, %v327
    %v338 = vpack.c.bf16 %v330, %v329
    %v339 = vld [vmem:[#allocation7] sm:$0xf]
    %v340 = vld [vmem:[#allocation7 + $0x4] sm:$0xf]
    %v341 = vld [vmem:[#allocation7 + $0x8] sm:$0xf]
    %v342 = vld [vmem:[#allocation7 + $0xc] sm:$0xf]
    %v343 = vld [vmem:[#allocation7 + $0x10] sm:$0xf]
    %v344 = vld [vmem:[#allocation7 + $0x14] sm:$0xf]
    %v345 = vld [vmem:[#allocation7 + $0x18] sm:$0xf]
    %v346 = vld [vmem:[#allocation7 + $0x1c] sm:$0xf]
    %v347 = vld [vmem:[#allocation7 + $0x20] sm:$0xf]
    %v348 = vld [vmem:[#allocation7 + $0x24] sm:$0xf]
    %v349 = vld [vmem:[#allocation7 + $0x28] sm:$0xf]
    %v350 = vld [vmem:[#allocation7 + $0x2c] sm:$0xf]
    %v351 = vld [vmem:[#allocation7 + $0x30] sm:$0xf]
    %v352 = vld [vmem:[#allocation7 + $0x34] sm:$0xf]
    %v353 = vld [vmem:[#allocation7 + $0x38] sm:$0xf]
    %v354 = vld [vmem:[#allocation7 + $0x3c] sm:$0xf]
    %v355 = vld [vmem:[%s4] sm:$0x1]
    %v357 = vlaneseq
    %v358 = vshrl.u32 %v357, 7
    %v359 = vsub.s32 0, %v358
    %v360 = vrot.slane %v355, %v359
    %v378 = vunpack.c.l.b16 %v339
    %v379 = vunpack.c.l.b16 %v340
    %v380 = vunpack.c.l.b16 %v341
    %v381 = vunpack.c.l.b16 %v342
    %v382 = vunpack.c.l.b16 %v343
    %v383 = vunpack.c.l.b16 %v344
    %v384 = vunpack.c.l.b16 %v345
    %v385 = vunpack.c.l.b16 %v346
    %v386 = vunpack.c.l.b16 %v347
    %v387 = vunpack.c.l.b16 %v348
    %v388 = vunpack.c.l.b16 %v349
    %v389 = vunpack.c.l.b16 %v350
    %v390 = vunpack.c.l.b16 %v351
    %v391 = vunpack.c.l.b16 %v352
    %v392 = vunpack.c.l.b16 %v353
    %v393 = vunpack.c.l.b16 %v354
    %v394 = vpack.c.b16 %v379, %v378
    %v395 = vpack.c.b16 %v381, %v380
    %v396 = vpack.c.b16 %v383, %v382
    %v397 = vpack.c.b16 %v385, %v384
    %v398 = vpack.c.b16 %v387, %v386
    %v399 = vpack.c.b16 %v389, %v388
    %v400 = vpack.c.b16 %v391, %v390
    %v401 = vpack.c.b16 %v393, %v392
    %410 = vmatprep.subr.bf16.mxu0 0
    %411 = vmatpush1.bf16.msra.mxu0 %v394
    %412 = vmatprep.subr.bf16.mxu0 0
    %413 = vmatpush1.bf16.msra.mxu0 %v395
    %414 = vmatprep.subr.bf16.mxu0 0
    %415 = vmatpush1.bf16.msra.mxu0 %v396
    %416 = vmatprep.subr.bf16.mxu0 0
    %417 = vmatpush1.bf16.msra.mxu0 %v397
    %418 = vmatprep.subr.bf16.mxu0 0
    %419 = vmatpush1.bf16.msra.mxu0 %v398
    %420 = vmatprep.subr.bf16.mxu0 0
    %421 = vmatpush1.bf16.msra.mxu0 %v399
    %422 = vmatprep.subr.bf16.mxu0 0
    %423 = vmatpush1.bf16.msra.mxu0 %v400
    %424 = vmatprep.subr.bf16.mxu0 0
    %425 = vmatpush1.bf16.msra.mxu0 %v401
    %426 = vmatprep.subr.bf16.mxu0 0
    %427 = vmatpush1.bf16.msra.mxu0 0
    %428 = vmatprep.subr.bf16.mxu0 0
    %429 = vmatpush1.bf16.msra.mxu0 0
    %430 = vmatprep.subr.bf16.mxu0 0
    %431 = vmatpush1.bf16.msra.mxu0 0
    %432 = vmatprep.subr.bf16.mxu0 0
    %433 = vmatpush1.bf16.msra.mxu0 0
    %434 = vmatprep.subr.bf16.mxu0 0
    %435 = vmatpush1.bf16.msra.mxu0 0
    %436 = vmatprep.subr.bf16.mxu0 0
    %437 = vmatpush1.bf16.msra.mxu0 0
    %438 = vmatprep.subr.bf16.mxu0 0
    %439 = vmatpush1.bf16.msra.mxu0 0
    %440 = vmatprep.subr.bf16.mxu0 0
    %441 = vmatpush1.bf16.msra.mxu0 0
    %442 = vmatprep.mubr.bf16.mxu0 0
    %443 = vmatmul.mubr.bf16.gmra.mrb[0].mxu0 %v331
    %v444 = vpop.f32.mrb[0].mxu0
    %v445 = vadd.f32 %v360, %v444
    %v446 = vpop.f32.mrb[0].mxu0
    %v447 = vpop.f32.mrb[0].mxu0
    %v448 = vadd.f32 %v360, %v447
    %v449 = vpop.f32.mrb[0].mxu0
    %450 = vmatprep.mubr.bf16.mxu0 0
    %451 = vmatmul.mubr.bf16.gmra.mrb[0].mxu0 %v332
    %v452 = vpop.f32.mrb[0].mxu0
    %v453 = vadd.f32 %v360, %v452
    %v454 = vpop.f32.mrb[0].mxu0
    %v455 = vpop.f32.mrb[0].mxu0
    %v456 = vadd.f32 %v360, %v455
    %v457 = vpop.f32.mrb[0].mxu0
    %458 = vmatprep.mubr.bf16.mxu0 0
    %459 = vmatmul.mubr.bf16.gmra.mrb[0].mxu0 %v333
    %v460 = vpop.f32.mrb[0].mxu0
    %v461 = vadd.f32 %v360, %v460
    %v462 = vpop.f32.mrb[0].mxu0
    %v463 = vpop.f32.mrb[0].mxu0
    %v464 = vadd.f32 %v360, %v463
    %v465 = vpop.f32.mrb[0].mxu0
    %466 = vmatprep.mubr.bf16.mxu0 0
    %467 = vmatmul.mubr.bf16.gmra.mrb[0].mxu0 %v334
    %v468 = vpop.f32.mrb[0].mxu0
    %v469 = vadd.f32 %v360, %v468
    %v470 = vpop.f32.mrb[0].mxu0
    %v471 = vpop.f32.mrb[0].mxu0
    %v472 = vadd.f32 %v360, %v471
    %v473 = vpop.f32.mrb[0].mxu0
    %474 = vmatprep.mubr.bf16.mxu0 0
    %475 = vmatmul.mubr.bf16.gmra.mrb[0].mxu0 %v335
    %v476 = vpop.f32.mrb[0].mxu0
    %v477 = vadd.f32 %v360, %v476
    %v478 = vpop.f32.mrb[0].mxu0
    %v479 = vpop.f32.mrb[0].mxu0
    %v480 = vadd.f32 %v360, %v479
    %v481 = vpop.f32.mrb[0].mxu0
    %482 = vmatprep.mubr.bf16.mxu0 0
    %483 = vmatmul.mubr.bf16.gmra.mrb[0].mxu0 %v336
    %v484 = vpop.f32.mrb[0].mxu0
    %v485 = vadd.f32 %v360, %v484
    %v486 = vpop.f32.mrb[0].mxu0
    %v487 = vpop.f32.mrb[0].mxu0
    %v488 = vadd.f32 %v360, %v487
    %v489 = vpop.f32.mrb[0].mxu0
    %490 = vmatprep.mubr.bf16.mxu0 0
    %491 = vmatmul.mubr.bf16.gmra.mrb[0].mxu0 %v337
    %v492 = vpop.f32.mrb[0].mxu0
    %v493 = vadd.f32 %v360, %v492
    %v494 = vpop.f32.mrb[0].mxu0
    %v495 = vpop.f32.mrb[0].mxu0
    %v496 = vadd.f32 %v360, %v495
    %v497 = vpop.f32.mrb[0].mxu0
    %498 = vmatprep.mubr.bf16.mxu0 0
    %499 = vmatmul.mubr.bf16.gmra.mrb[0].mxu0 %v338
    %v500 = vpop.f32.mrb[0].mxu0
    %v501 = vadd.f32 %v360, %v500
    %v502 = vpop.f32.mrb[0].mxu0
    %v503 = vpop.f32.mrb[0].mxu0
    %v504 = vadd.f32 %v360, %v503
    %v505 = vpop.f32.mrb[0].mxu0
    %506 = vdwg.mxu0
    %v507 = vmax.f32 %v445, 0.0
    %v508 = vmax.f32 %v448, 0.0
    %v509 = vmax.f32 %v453, 0.0
    %v510 = vmax.f32 %v456, 0.0
    %v511 = vmax.f32 %v461, 0.0
    %v512 = vmax.f32 %v464, 0.0
    %v513 = vmax.f32 %v469, 0.0
    %v514 = vmax.f32 %v472, 0.0
    %v515 = vmax.f32 %v477, 0.0
    %v516 = vmax.f32 %v480, 0.0
    %v517 = vmax.f32 %v485, 0.0
    %v518 = vmax.f32 %v488, 0.0
    %v519 = vmax.f32 %v493, 0.0
    %v520 = vmax.f32 %v496, 0.0
    %v521 = vmax.f32 %v501, 0.0
    %v522 = vmax.f32 %v504, 0.0
    %v523 = vpack.c.bf16 %v508, %v507
    %v524 = vpack.c.bf16 %v510, %v509
    %v525 = vpack.c.bf16 %v512, %v511
    %v526 = vpack.c.bf16 %v514, %v513
    %v527 = vpack.c.bf16 %v516, %v515
    %v528 = vpack.c.bf16 %v518, %v517
    %v529 = vpack.c.bf16 %v520, %v519
    %v530 = vpack.c.bf16 %v522, %v521
    %v531 = vld [vmem:[#allocation8] sm:$0xf]
    %v532 = vld [vmem:[#allocation8 + $0x4] sm:$0xf]
    %v533 = vld [vmem:[#allocation8 + $0x8] sm:$0xf]
    %v534 = vld [vmem:[#allocation8 + $0xc] sm:$0xf]
    %v535 = vld [vmem:[#allocation8 + $0x10] sm:$0xf]
    %v536 = vld [vmem:[#allocation8 + $0x14] sm:$0xf]
    %v537 = vld [vmem:[#allocation8 + $0x18] sm:$0xf]
    %v538 = vld [vmem:[#allocation8 + $0x1c] sm:$0xf]
    %v539 = vld [vmem:[#allocation8 + $0x20] sm:$0xf]
    %v540 = vld [vmem:[#allocation8 + $0x24] sm:$0xf]
    %v541 = vld [vmem:[#allocation8 + $0x28] sm:$0xf]
    %v542 = vld [vmem:[#allocation8 + $0x2c] sm:$0xf]
    %v543 = vld [vmem:[#allocation8 + $0x30] sm:$0xf]
    %v544 = vld [vmem:[#allocation8 + $0x34] sm:$0xf]
    %v545 = vld [vmem:[#allocation8 + $0x38] sm:$0xf]
    %v546 = vld [vmem:[#allocation8 + $0x3c] sm:$0xf]
    %v547 = vld [vmem:[%s6] sm:$0x1]
    %v549 = vlaneseq
    %v550 = vshrl.u32 %v549, 7
    %v551 = vsub.s32 0, %v550
    %v552 = vrot.slane %v547, %v551
    %v570 = vunpack.c.l.b16 %v531
    %v571 = vunpack.c.l.b16 %v532
    %v572 = vunpack.c.l.b16 %v533
    %v573 = vunpack.c.l.b16 %v534
    %v574 = vunpack.c.l.b16 %v535
    %v575 = vunpack.c.l.b16 %v536
    %v576 = vunpack.c.l.b16 %v537
    %v577 = vunpack.c.l.b16 %v538
    %v578 = vunpack.c.l.b16 %v539
    %v579 = vunpack.c.l.b16 %v540
    %v580 = vunpack.c.l.b16 %v541
    %v581 = vunpack.c.l.b16 %v542
    %v582 = vunpack.c.l.b16 %v543
    %v583 = vunpack.c.l.b16 %v544
    %v584 = vunpack.c.l.b16 %v545
    %v585 = vunpack.c.l.b16 %v546
    %v586 = vpack.c.b16 %v571, %v570
    %v587 = vpack.c.b16 %v573, %v572
    %v588 = vpack.c.b16 %v575, %v574
    %v589 = vpack.c.b16 %v577, %v576
    %v590 = vpack.c.b16 %v579, %v578
    %v591 = vpack.c.b16 %v581, %v580
    %v592 = vpack.c.b16 %v583, %v582
    %v593 = vpack.c.b16 %v585, %v584
    %602 = vmatprep.subr.bf16.mxu0 0
    %603 = vmatpush1.bf16.msra.mxu0 %v586
    %604 = vmatprep.subr.bf16.mxu0 0
    %605 = vmatpush1.bf16.msra.mxu0 %v587
    %606 = vmatprep.subr.bf16.mxu0 0
    %607 = vmatpush1.bf16.msra.mxu0 %v588
    %608 = vmatprep.subr.bf16.mxu0 0
    %609 = vmatpush1.bf16.msra.mxu0 %v589
    %610 = vmatprep.subr.bf16.mxu0 0
    %611 = vmatpush1.bf16.msra.mxu0 %v590
    %612 = vmatprep.subr.bf16.mxu0 0
    %613 = vmatpush1.bf16.msra.mxu0 %v591
    %614 = vmatprep.subr.bf16.mxu0 0
    %615 = vmatpush1.bf16.msra.mxu0 %v592
    %616 = vmatprep.subr.bf16.mxu0 0
    %617 = vmatpush1.bf16.msra.mxu0 %v593
    %618 = vmatprep.subr.bf16.mxu0 0
    %619 = vmatpush1.bf16.msra.mxu0 0
    %620 = vmatprep.subr.bf16.mxu0 0
    %621 = vmatpush1.bf16.msra.mxu0 0
    %622 = vmatprep.subr.bf16.mxu0 0
    %623 = vmatpush1.bf16.msra.mxu0 0
    %624 = vmatprep.subr.bf16.mxu0 0
    %625 = vmatpush1.bf16.msra.mxu0 0
    %626 = vmatprep.subr.bf16.mxu0 0
    %627 = vmatpush1.bf16.msra.mxu0 0
    %628 = vmatprep.subr.bf16.mxu0 0
    %629 = vmatpush1.bf16.msra.mxu0 0
    %630 = vmatprep.subr.bf16.mxu0 0
    %631 = vmatpush1.bf16.msra.mxu0 0
    %632 = vmatprep.subr.bf16.mxu0 0
    %633 = vmatpush1.bf16.msra.mxu0 0
    %634 = vmatprep.mubr.bf16.mxu0 0
    %635 = vmatmul.mubr.bf16.gmra.mrb[0].mxu0 %v523
    %v636 = vpop.f32.mrb[0].mxu0
    %v637 = vadd.f32 %v552, %v636
    %v638 = vpop.f32.mrb[0].mxu0
    %v639 = vpop.f32.mrb[0].mxu0
    %v640 = vadd.f32 %v552, %v639
    %v641 = vpop.f32.mrb[0].mxu0
    %642 = vmatprep.mubr.bf16.mxu0 0
    %643 = vmatmul.mubr.bf16.gmra.mrb[0].mxu0 %v524
    %v644 = vpop.f32.mrb[0].mxu0
    %v645 = vadd.f32 %v552, %v644
    %v646 = vpop.f32.mrb[0].mxu0
    %v647 = vpop.f32.mrb[0].mxu0
    %v648 = vadd.f32 %v552, %v647
    %v649 = vpop.f32.mrb[0].mxu0
    %650 = vmatprep.mubr.bf16.mxu0 0
    %651 = vmatmul.mubr.bf16.gmra.mrb[0].mxu0 %v525
    %v652 = vpop.f32.mrb[0].mxu0
    %v653 = vadd.f32 %v552, %v652
    %v654 = vpop.f32.mrb[0].mxu0
    %v655 = vpop.f32.mrb[0].mxu0
    %v656 = vadd.f32 %v552, %v655
    %v657 = vpop.f32.mrb[0].mxu0
    %658 = vmatprep.mubr.bf16.mxu0 0
    %659 = vmatmul.mubr.bf16.gmra.mrb[0].mxu0 %v526
    %v660 = vpop.f32.mrb[0].mxu0
    %v661 = vadd.f32 %v552, %v660
    %v662 = vpop.f32.mrb[0].mxu0
    %v663 = vpop.f32.mrb[0].mxu0
    %v664 = vadd.f32 %v552, %v663
    %v665 = vpop.f32.mrb[0].mxu0
    %666 = vmatprep.mubr.bf16.mxu0 0
    %667 = vmatmul.mubr.bf16.gmra.mrb[0].mxu0 %v527
    %v668 = vpop.f32.mrb[0].mxu0
    %v669 = vadd.f32 %v552, %v668
    %v670 = vpop.f32.mrb[0].mxu0
    %v671 = vpop.f32.mrb[0].mxu0
    %v672 = vadd.f32 %v552, %v671
    %v673 = vpop.f32.mrb[0].mxu0
    %674 = vmatprep.mubr.bf16.mxu0 0
    %675 = vmatmul.mubr.bf16.gmra.mrb[0].mxu0 %v528
    %v676 = vpop.f32.mrb[0].mxu0
    %v677 = vadd.f32 %v552, %v676
    %v678 = vpop.f32.mrb[0].mxu0
    %v679 = vpop.f32.mrb[0].mxu0
    %v680 = vadd.f32 %v552, %v679
    %v681 = vpop.f32.mrb[0].mxu0
    %682 = vmatprep.mubr.bf16.mxu0 0
    %683 = vmatmul.mubr.bf16.gmra.mrb[0].mxu0 %v529
    %v684 = vpop.f32.mrb[0].mxu0
    %v685 = vadd.f32 %v552, %v684
    %v686 = vpop.f32.mrb[0].mxu0
    %v687 = vpop.f32.mrb[0].mxu0
    %v688 = vadd.f32 %v552, %v687
    %v689 = vpop.f32.mrb[0].mxu0
    %690 = vmatprep.mubr.bf16.mxu0 0
    %691 = vmatmul.mubr.bf16.gmra.mrb[0].mxu0 %v530
    %v692 = vpop.f32.mrb[0].mxu0
    %v693 = vadd.f32 %v552, %v692
    %v694 = vpop.f32.mrb[0].mxu0
    %v695 = vpop.f32.mrb[0].mxu0
    %v696 = vadd.f32 %v552, %v695
    %v697 = vpop.f32.mrb[0].mxu0
    %698 = vdwg.mxu0
    %v699 = vlaneseq
    %v700 = vand.u32 %v699, 127
    %vm701 = vcmp.lt.s32.totalorder %v700, 16
    %v702 = vsel %vm701, %v637, -1e+30
    %v703 = vsel %vm701, %v640, -1e+30
    %v704 = vsel %vm701, %v645, -1e+30
    %v705 = vsel %vm701, %v648, -1e+30
    %v706 = vsel %vm701, %v653, -1e+30
    %v707 = vsel %vm701, %v656, -1e+30
    %v708 = vsel %vm701, %v661, -1e+30
    %v709 = vsel %vm701, %v664, -1e+30
    %v710 = vsel %vm701, %v669, -1e+30
    %v711 = vsel %vm701, %v672, -1e+30
    %v712 = vsel %vm701, %v677, -1e+30
    %v713 = vsel %vm701, %v680, -1e+30
    %v714 = vsel %vm701, %v685, -1e+30
    %v715 = vsel %vm701, %v688, -1e+30
    %v716 = vsel %vm701, %v693, -1e+30
    %v717 = vsel %vm701, %v696, -1e+30
    %718 = vmax.xlane.f32.xlu0 %v702
    %v719 = vpop.xlane.xlu0 %718
    %720 = vmax.xlane.f32.xlu0 %v703
    %v721 = vpop.xlane.xlu0 %720
    %722 = vmax.xlane.f32.xlu0 %v704
    %v723 = vpop.xlane.xlu0 %722
    %724 = vmax.xlane.f32.xlu0 %v705
    %v725 = vpop.xlane.xlu0 %724
    %726 = vmax.xlane.f32.xlu0 %v706
    %v727 = vpop.xlane.xlu0 %726
    %728 = vmax.xlane.f32.xlu0 %v707
    %v729 = vpop.xlane.xlu0 %728
    %730 = vmax.xlane.f32.xlu0 %v708
    %v731 = vpop.xlane.xlu0 %730
    %732 = vmax.xlane.f32.xlu0 %v709
    %v733 = vpop.xlane.xlu0 %732
    %734 = vmax.xlane.f32.xlu0 %v710
    %v735 = vpop.xlane.xlu0 %734
    %736 = vmax.xlane.f32.xlu0 %v711
    %v737 = vpop.xlane.xlu0 %736
    %738 = vmax.xlane.f32.xlu0 %v712
    %v739 = vpop.xlane.xlu0 %738
    %740 = vmax.xlane.f32.xlu0 %v713
    %v741 = vpop.xlane.xlu0 %740
    %742 = vmax.xlane.f32.xlu0 %v714
    %v743 = vpop.xlane.xlu0 %742
    %744 = vmax.xlane.f32.xlu0 %v715
    %v745 = vpop.xlane.xlu0 %744
    %746 = vmax.xlane.f32.xlu0 %v716
    %v747 = vpop.xlane.xlu0 %746
    %748 = vmax.xlane.f32.xlu0 %v717
    %v749 = vpop.xlane.xlu0 %748
    %v750 = vsub.f32 %v702, %v719
    %v751 = vsub.f32 %v703, %v721
    %v752 = vsub.f32 %v704, %v723
    %v753 = vsub.f32 %v705, %v725
    %v754 = vsub.f32 %v706, %v727
    %v755 = vsub.f32 %v707, %v729
    %v756 = vsub.f32 %v708, %v731
    %v757 = vsub.f32 %v709, %v733
    %v758 = vsub.f32 %v710, %v735
    %v759 = vsub.f32 %v711, %v737
    %v760 = vsub.f32 %v712, %v739
    %v761 = vsub.f32 %v713, %v741
    %v762 = vsub.f32 %v714, %v743
    %v763 = vsub.f32 %v715, %v745
    %v764 = vsub.f32 %v716, %v747
    %v765 = vsub.f32 %v717, %v749
    %v766 = vmul.f32 %v750, 1.442695
    %v767 = vpow.pop %v766
    %v768 = vmul.f32 %v751, 1.442695
    %v769 = vpow.pop %v768
    %v770 = vmul.f32 %v752, 1.442695
    %v771 = vpow.pop %v770
    %v772 = vmul.f32 %v753, 1.442695
    %v773 = vpow.pop %v772
    %v774 = vmul.f32 %v754, 1.442695
    %v775 = vpow.pop %v774
    %v776 = vmul.f32 %v755, 1.442695
    %v777 = vpow.pop %v776
    %v778 = vmul.f32 %v756, 1.442695
    %v779 = vpow.pop %v778
    %v780 = vmul.f32 %v757, 1.442695
    %v781 = vpow.pop %v780
    %v782 = vmul.f32 %v758, 1.442695
    %v783 = vpow.pop %v782
    %v784 = vmul.f32 %v759, 1.442695
    %v785 = vpow.pop %v784
    %v786 = vmul.f32 %v760, 1.442695
    %v787 = vpow.pop %v786
    %v788 = vmul.f32 %v761, 1.442695
    %v789 = vpow.pop %v788
    %v790 = vmul.f32 %v762, 1.442695
    %v791 = vpow.pop %v790
    %v792 = vmul.f32 %v763, 1.442695
    %v793 = vpow.pop %v792
    %v794 = vmul.f32 %v764, 1.442695
    %v795 = vpow.pop %v794
    %v796 = vmul.f32 %v765, 1.442695
    %v797 = vpow.pop %v796
    %798 = vadd.xlane.f32.xlu0 %v767
    %v799 = vpop.xlane.xlu0 %798
    %800 = vadd.xlane.f32.xlu0 %v769
    %v801 = vpop.xlane.xlu0 %800
    %802 = vadd.xlane.f32.xlu0 %v771
    %v803 = vpop.xlane.xlu0 %802
    %804 = vadd.xlane.f32.xlu0 %v773
    %v805 = vpop.xlane.xlu0 %804
    %806 = vadd.xlane.f32.xlu0 %v775
    %v807 = vpop.xlane.xlu0 %806
    %808 = vadd.xlane.f32.xlu0 %v777
    %v809 = vpop.xlane.xlu0 %808
    %810 = vadd.xlane.f32.xlu0 %v779
    %v811 = vpop.xlane.xlu0 %810
    %812 = vadd.xlane.f32.xlu0 %v781
    %v813 = vpop.xlane.xlu0 %812
    %814 = vadd.xlane.f32.xlu0 %v783
    %v815 = vpop.xlane.xlu0 %814
    %816 = vadd.xlane.f32.xlu0 %v785
    %v817 = vpop.xlane.xlu0 %816
    %818 = vadd.xlane.f32.xlu0 %v787
    %v819 = vpop.xlane.xlu0 %818
    %820 = vadd.xlane.f32.xlu0 %v789
    %v821 = vpop.xlane.xlu0 %820
    %822 = vadd.xlane.f32.xlu0 %v791
    %v823 = vpop.xlane.xlu0 %822
    %824 = vadd.xlane.f32.xlu0 %v793
    %v825 = vpop.xlane.xlu0 %824
    %826 = vadd.xlane.f32.xlu0 %v795
    %v827 = vpop.xlane.xlu0 %826
    %828 = vadd.xlane.f32.xlu0 %v797
    %v829 = vpop.xlane.xlu0 %828
    %v830 = vlog2.pop %v799
    %v831 = vmul.f32 %v830, 0.6931472
    %v832 = vlog2.pop %v801
    %v833 = vmul.f32 %v832, 0.6931472
    %v834 = vlog2.pop %v803
    %v835 = vmul.f32 %v834, 0.6931472
    %v836 = vlog2.pop %v805
    %v837 = vmul.f32 %v836, 0.6931472
    %v838 = vlog2.pop %v807
    %v839 = vmul.f32 %v838, 0.6931472
    %v840 = vlog2.pop %v809
    %v841 = vmul.f32 %v840, 0.6931472
    %v842 = vlog2.pop %v811
    %v843 = vmul.f32 %v842, 0.6931472
    %v844 = vlog2.pop %v813
    %v845 = vmul.f32 %v844, 0.6931472
    %v846 = vlog2.pop %v815
    %v847 = vmul.f32 %v846, 0.6931472
    %v848 = vlog2.pop %v817
    %v849 = vmul.f32 %v848, 0.6931472
    %v850 = vlog2.pop %v819
    %v851 = vmul.f32 %v850, 0.6931472
    %v852 = vlog2.pop %v821
    %v853 = vmul.f32 %v852, 0.6931472
    %v854 = vlog2.pop %v823
    %v855 = vmul.f32 %v854, 0.6931472
    %v856 = vlog2.pop %v825
    %v857 = vmul.f32 %v856, 0.6931472
    %v858 = vlog2.pop %v827
    %v859 = vmul.f32 %v858, 0.6931472
    %v860 = vlog2.pop %v829
    %v861 = vmul.f32 %v860, 0.6931472
    %v862 = vadd.f32 %v719, %v831
    %v863 = vadd.f32 %v721, %v833
    %v864 = vadd.f32 %v723, %v835
    %v865 = vadd.f32 %v725, %v837
    %v866 = vadd.f32 %v727, %v839
    %v867 = vadd.f32 %v729, %v841
    %v868 = vadd.f32 %v731, %v843
    %v869 = vadd.f32 %v733, %v845
    %v870 = vadd.f32 %v735, %v847
    %v871 = vadd.f32 %v737, %v849
    %v872 = vadd.f32 %v739, %v851
    %v873 = vadd.f32 %v741, %v853
    %v874 = vadd.f32 %v743, %v855
    %v875 = vadd.f32 %v745, %v857
    %v876 = vadd.f32 %v747, %v859
    %v877 = vadd.f32 %v749, %v861
    %v878 = vsub.f32 %v702, %v862
    %v879 = vsub.f32 %v703, %v863
    %v880 = vsub.f32 %v704, %v864
    %v881 = vsub.f32 %v705, %v865
    %v882 = vsub.f32 %v706, %v866
    %v883 = vsub.f32 %v707, %v867
    %v884 = vsub.f32 %v708, %v868
    %v885 = vsub.f32 %v709, %v869
    %v886 = vsub.f32 %v710, %v870
    %v887 = vsub.f32 %v711, %v871
    %v888 = vsub.f32 %v712, %v872
    %v889 = vsub.f32 %v713, %v873
    %v890 = vsub.f32 %v714, %v874
    %v891 = vsub.f32 %v715, %v875
    %v892 = vsub.f32 %v716, %v876
    %v893 = vsub.f32 %v717, %v877
    %894 = vst [vmem:[#allocation10] sm:$0xff] %v878
    %895 = vst [vmem:[#allocation10 + $0x8] sm:$0xff] %v879
    %896 = vst [vmem:[#allocation10 + $0x10] sm:$0xff] %v880
    %897 = vst [vmem:[#allocation10 + $0x18] sm:$0xff] %v881
    %898 = vst [vmem:[#allocation10 + $0x20] sm:$0xff] %v882
    %899 = vst [vmem:[#allocation10 + $0x28] sm:$0xff] %v883
    %900 = vst [vmem:[#allocation10 + $0x30] sm:$0xff] %v884
    %901 = vst [vmem:[#allocation10 + $0x38] sm:$0xff] %v885
    %902 = vst [vmem:[#allocation10 + $0x40] sm:$0xff] %v886
    %903 = vst [vmem:[#allocation10 + $0x48] sm:$0xff] %v887
    %904 = vst [vmem:[#allocation10 + $0x50] sm:$0xff] %v888
    %905 = vst [vmem:[#allocation10 + $0x58] sm:$0xff] %v889
    %906 = vst [vmem:[#allocation10 + $0x60] sm:$0xff] %v890
    %907 = vst [vmem:[#allocation10 + $0x68] sm:$0xff] %v891
    %908 = vst [vmem:[#allocation10 + $0x70] sm:$0xff] %v892
    %909 = vst [vmem:[#allocation10 + $0x78] sm:$0xff] %v893
    // Predicated region
    $region46: #{tpu_custom_call.1} parent=1 // pred_check
      _
    $region47: #{tpu_custom_call.1} parent=1 // pred_check_branch
      %911 = sbr.rel (0) target = $region49
    $region48: #{tpu_custom_call.1} parent=1 // pred_region
      %s913 = ssub.s32 2048, 2048
      %914 = vsyncadd [#allocation4], %s913
      %s915 = sshll.u32 [#allocation10], 4
      %s916 = int_to_ptr.vmem [resolvable:$true] %s915
      %921 = dma.vmem_to_hbm [thread:$0]  %s916, 2048, %s7, [#allocation4], 128, 128, 8
    $region49: #{tpu_custom_call.1} parent=1 // pred_fallthru
      _
    // Predicated region
    $region50: #{tpu_custom_call.1} parent=1 // pred_check
      _
    $region51: #{tpu_custom_call.1} parent=1 // pred_check_branch
      %923 = sbr.rel (0) target = $region53
    $region52: #{tpu_custom_call.1} parent=1 // pred_region
      %924 = dma.done [#allocation4], 2048
    $region53: #{tpu_custom_call.1} parent=1 // pred_fallthru
      _
    %925 = vsyncpa [#allocation3], 1
    %926 = vsyncpa [#allocation6], 1
    %927 = vsyncpa [#allocation9], 1
    %928 = vsyncpa [#allocation4], 1

</llo_original>
